<compile_context>
chip_gen: v7x
topology: tpu7x:2x2x1
jax: 0.10.0
libtpu: 0.0.40
codegen_flags: <defaults>
</compile_context>

<pallas_src>
import math

import jax
import jax.numpy as jnp
from jax.experimental import pallas as pl
from jax.experimental.pallas import tpu as pltpu  # noqa: F401  (kept for CompilerParams if needed)

PAD = 128          # lane width; every layer's feature dim is zero-padded to this
HID1, HID2, HID3 = 16, 32, 64


def _make_kernel(batch: int, action_size: int):
    """Build the kernel with compile-time constants baked in."""
    inv_ba = 1.0 / float(batch * action_size)   # Python-constant reciprocal

    def kernel(x_ref, w_ref, b_ref, out_ref):
        # x_ref : (B, 128)      zero-padded activations
        # w_ref : (4, 128, 128) zero-padded [W1, W2, W3, Wa|Wv] (in, out) layout
        # b_ref : (4, 128)      zero-padded [b1, b2, b3, ba|bv]
        b_all = b_ref[...]                                  # (4, 128), tiny
        h = x_ref[...]                                      # (B, 128)

        # Three hidden layers. Padded columns are exactly 0 after each layer
        # (zero weight cols + zero bias cols + leaky_relu(0) == 0).
        for i in range(3):
            h = jnp.dot(h, w_ref[i], preferred_element_type=jnp.float32)
            h = h + b_all[i:i + 1, :]
            h = jnp.where(h > 0, h, 0.01 * h)               # leaky_relu, slope 0.01

        # Fused value+advantage head: cols [0:A] = advantage, col A = value.
        head = jnp.dot(h, w_ref[3], preferred_element_type=jnp.float32)
        head = head + b_all[3:4, :]

        adv = head[:, :action_size]                         # (B, A)
        value = head[:, action_size:action_size + 1]        # (B, 1)

        adv_mean = jnp.sum(adv) * inv_ba                    # mean over ALL elements
        out_ref[...] = value + (adv - adv_mean)

    return kernel


def pack_params(params, state_size: int, action_size: int):
    """Pack the 10 Linear tensors into one weight buffer and one bias buffer.

    Weights are (in_features, out_features) (transposed vs PyTorch), zero-padded
    to (128, 128) slabs; biases zero-padded to 128 lanes. The value head is
    placed in column `action_size` of slab 3 (advantage occupies cols [0, A)).
    """
    assert state_size <= PAD and action_size + 1 <= PAD

    w = jnp.zeros((4, PAD, PAD), jnp.float32)
    w = w.at[0, :state_size, :HID1].set(params["w1"])
    w = w.at[1, :HID1, :HID2].set(params["w2"])
    w = w.at[2, :HID2, :HID3].set(params["w3"])
    w = w.at[3, :HID3, :action_size].set(params["wa"])
    w = w.at[3, :HID3, action_size:action_size + 1].set(params["wv"])

    b = jnp.zeros((4, PAD), jnp.float32)
    b = b.at[0, :HID1].set(params["b1"].reshape(-1))
    b = b.at[1, :HID2].set(params["b2"].reshape(-1))
    b = b.at[2, :HID3].set(params["b3"].reshape(-1))
    b = b.at[3, :action_size].set(params["ba"].reshape(-1))
    b = b.at[3, action_size].set(params["bv"].reshape(-1)[0])
    return w, b


def advantage_network_forward(x, w_packed, b_packed, action_size: int):
    """x: (B, state_size) f32. w_packed: (4,128,128). b_packed: (4,128)."""
    B, S = x.shape
    # Zero-pad activations to lane width once in the wrapper (single cheap XLA op).
    x_pad = jnp.zeros((B, PAD), x.dtype).at[:, :S].set(x)

    kernel = _make_kernel(B, action_size)

    return pl.pallas_call(
        kernel,
        out_shape=jax.ShapeDtypeStruct((B, action_size), jnp.float32),
        grid=(),  # whole problem is one VMEM-resident block (see scaling notes above)
        in_specs=[
            pl.BlockSpec((B, PAD), lambda: (0, 0)),
            pl.BlockSpec((4, PAD, PAD), lambda: (0, 0, 0)),
            pl.BlockSpec((4, PAD), lambda: (0, 0)),
        ],
        out_specs=pl.BlockSpec((B, action_size), lambda: (0, 0)),
    )(x_pad, w_packed, b_packed)


def init_params(key, state_size, action_size):
    """Deterministic init mimicking nn.Linear's U(-1/sqrt(fan_in), 1/sqrt(fan_in)).

    Weights stored as (in_features, out_features); biases as (1, out_features).
    """
    dims = [
        ("w1", "b1", state_size, HID1),
        ("w2", "b2", HID1, HID2),
        ("w3", "b3", HID2, HID3),
        ("wv", "bv", HID3, 1),
        ("wa", "ba", HID3, action_size),
    ]
    params = {}
    for wname, bname, fan_in, fan_out in dims:
        key, kw, kb = jax.random.split(key, 3)
        bound = 1.0 / math.sqrt(fan_in)
        params[wname] = jax.random.uniform(
            kw, (fan_in, fan_out), jnp.float32, -bound, bound)
        params[bname] = jax.random.uniform(
            kb, (1, fan_out), jnp.float32, -bound, bound)
    return params


def _leaky(z):
    return jnp.where(z > 0, z, 0.01 * z)


def _reference_forward(x, params):
    """Pure-JAX reference for correctness."""
    h = _leaky(x @ params["w1"] + params["b1"])
    h = _leaky(h @ params["w2"] + params["b2"])
    h = _leaky(h @ params["w3"] + params["b3"])
    value = h @ params["wv"] + params["bv"]
    adv = h @ params["wa"] + params["ba"]
    return value + (adv - jnp.mean(adv))


if __name__ == "__main__":
    state_size = 8
    action_size = 4
    batch = 8

    key = jax.random.PRNGKey(0)
    key, kx = jax.random.split(key)
    x = jax.random.normal(kx, (batch, state_size), jnp.float32)

    params = init_params(jax.random.PRNGKey(0), state_size, action_size)
    w_packed, b_packed = pack_params(params, state_size, action_size)

    out = advantage_network_forward(x, w_packed, b_packed, action_size)
    out = jax.block_until_ready(out)

    ref = _reference_forward(x, params)
    assert out.shape == (batch, action_size)
    assert jnp.allclose(out, ref, atol=1e-5, rtol=1e-5), "mismatch vs reference"

    print("KERNEL_OK")
</pallas_src>

<mosaic_0001>
module attributes {stable_mosaic.version = 11 : i64} {
  func.func @kernel(%arg0: memref<8x128xf32, #tpu.memory_space<vmem>>, %arg1: memref<4x128x128xf32, #tpu.memory_space<vmem>>, %arg2: memref<4x128xf32, #tpu.memory_space<vmem>>, %arg3: memref<8x4xf32, #tpu.memory_space<vmem>>) attributes {dimension_semantics = [], scalar_prefetch = 0 : i64, scratch_operands = 0 : i64, tpu.core_type = #tpu.core_type<tc>} {
    %c0 = arith.constant 0 : index
    %c0_0 = arith.constant 0 : index
    %0 = vector.load %arg2[%c0, %c0_0] : memref<4x128xf32, #tpu.memory_space<vmem>>, vector<4x128xf32>
    %c0_1 = arith.constant 0 : index
    %c0_2 = arith.constant 0 : index
    %1 = vector.load %arg0[%c0_1, %c0_2] : memref<8x128xf32, #tpu.memory_space<vmem>>, vector<8x128xf32>
    %c0_3 = arith.constant 0 : index
    %c0_4 = arith.constant 0 : index
    %c0_5 = arith.constant 0 : index
    %2 = vector.load %arg1[%c0_3, %c0_4, %c0_5] : memref<4x128x128xf32, #tpu.memory_space<vmem>>, vector<1x128x128xf32>
    %3 = vector.shape_cast %2 : vector<1x128x128xf32> to vector<128x128xf32>
    %cst = arith.constant dense<0.000000e+00> : vector<8x128xf32>
    %4 = tpu.matmul %1, %3, %cst {dimension_numbers = #tpu.dot_dimension_numbers<[1], [0], [0], [1], [0, 0, 1, 1], [], []>} : vector<8x128xf32>, vector<128x128xf32>, vector<8x128xf32> -> vector<8x128xf32>
    %5 = vector.extract_strided_slice %0 {offsets = [0, 0], sizes = [1, 128], strides = [1, 1]} : vector<4x128xf32> to vector<1x128xf32>
    %6 = vector.broadcast %5 : vector<1x128xf32> to vector<8x128xf32>
    %7 = arith.addf %4, %6 : vector<8x128xf32>
    %cst_6 = arith.constant 0.000000e+00 : f32
    %8 = vector.broadcast %cst_6 : f32 to vector<8x128xf32>
    %9 = arith.cmpf ogt, %7, %8 : vector<8x128xf32>
    %cst_7 = arith.constant 0.00999999977 : f32
    %10 = vector.broadcast %cst_7 : f32 to vector<8x128xf32>
    %11 = arith.mulf %10, %7 : vector<8x128xf32>
    %12 = arith.select %9, %7, %11 : vector<8x128xi1>, vector<8x128xf32>
    %c1 = arith.constant 1 : index
    %c0_8 = arith.constant 0 : index
    %c0_9 = arith.constant 0 : index
    %13 = vector.load %arg1[%c1, %c0_8, %c0_9] : memref<4x128x128xf32, #tpu.memory_space<vmem>>, vector<1x128x128xf32>
    %14 = vector.shape_cast %13 : vector<1x128x128xf32> to vector<128x128xf32>
    %cst_10 = arith.constant dense<0.000000e+00> : vector<8x128xf32>
    %15 = tpu.matmul %12, %14, %cst_10 {dimension_numbers = #tpu.dot_dimension_numbers<[1], [0], [0], [1], [0, 0, 1, 1], [], []>} : vector<8x128xf32>, vector<128x128xf32>, vector<8x128xf32> -> vector<8x128xf32>
    %16 = vector.extract_strided_slice %0 {offsets = [1, 0], sizes = [1, 128], strides = [1, 1]} : vector<4x128xf32> to vector<1x128xf32>
    %17 = vector.broadcast %16 : vector<1x128xf32> to vector<8x128xf32>
    %18 = arith.addf %15, %17 : vector<8x128xf32>
    %cst_11 = arith.constant 0.000000e+00 : f32
    %19 = vector.broadcast %cst_11 : f32 to vector<8x128xf32>
    %20 = arith.cmpf ogt, %18, %19 : vector<8x128xf32>
    %cst_12 = arith.constant 0.00999999977 : f32
    %21 = vector.broadcast %cst_12 : f32 to vector<8x128xf32>
    %22 = arith.mulf %21, %18 : vector<8x128xf32>
    %23 = arith.select %20, %18, %22 : vector<8x128xi1>, vector<8x128xf32>
    %c2 = arith.constant 2 : index
    %c0_13 = arith.constant 0 : index
    %c0_14 = arith.constant 0 : index
    %24 = vector.load %arg1[%c2, %c0_13, %c0_14] : memref<4x128x128xf32, #tpu.memory_space<vmem>>, vector<1x128x128xf32>
    %25 = vector.shape_cast %24 : vector<1x128x128xf32> to vector<128x128xf32>
    %cst_15 = arith.constant dense<0.000000e+00> : vector<8x128xf32>
    %26 = tpu.matmul %23, %25, %cst_15 {dimension_numbers = #tpu.dot_dimension_numbers<[1], [0], [0], [1], [0, 0, 1, 1], [], []>} : vector<8x128xf32>, vector<128x128xf32>, vector<8x128xf32> -> vector<8x128xf32>
    %27 = vector.extract_strided_slice %0 {offsets = [2, 0], sizes = [1, 128], strides = [1, 1]} : vector<4x128xf32> to vector<1x128xf32>
    %28 = vector.broadcast %27 : vector<1x128xf32> to vector<8x128xf32>
    %29 = arith.addf %26, %28 : vector<8x128xf32>
    %cst_16 = arith.constant 0.000000e+00 : f32
    %30 = vector.broadcast %cst_16 : f32 to vector<8x128xf32>
    %31 = arith.cmpf ogt, %29, %30 : vector<8x128xf32>
    %cst_17 = arith.constant 0.00999999977 : f32
    %32 = vector.broadcast %cst_17 : f32 to vector<8x128xf32>
    %33 = arith.mulf %32, %29 : vector<8x128xf32>
    %34 = arith.select %31, %29, %33 : vector<8x128xi1>, vector<8x128xf32>
    %c3 = arith.constant 3 : index
    %c0_18 = arith.constant 0 : index
    %c0_19 = arith.constant 0 : index
    %35 = vector.load %arg1[%c3, %c0_18, %c0_19] : memref<4x128x128xf32, #tpu.memory_space<vmem>>, vector<1x128x128xf32>
    %36 = vector.shape_cast %35 : vector<1x128x128xf32> to vector<128x128xf32>
    %cst_20 = arith.constant dense<0.000000e+00> : vector<8x128xf32>
    %37 = tpu.matmul %34, %36, %cst_20 {dimension_numbers = #tpu.dot_dimension_numbers<[1], [0], [0], [1], [0, 0, 1, 1], [], []>} : vector<8x128xf32>, vector<128x128xf32>, vector<8x128xf32> -> vector<8x128xf32>
    %38 = vector.extract_strided_slice %0 {offsets = [3, 0], sizes = [1, 128], strides = [1, 1]} : vector<4x128xf32> to vector<1x128xf32>
    %39 = vector.broadcast %38 : vector<1x128xf32> to vector<8x128xf32>
    %40 = arith.addf %37, %39 : vector<8x128xf32>
    %41 = vector.extract_strided_slice %40 {offsets = [0, 0], sizes = [8, 4], strides = [1, 1]} : vector<8x128xf32> to vector<8x4xf32>
    %42 = vector.extract_strided_slice %40 {offsets = [0, 4], sizes = [8, 1], strides = [1, 1]} : vector<8x128xf32> to vector<8x1xf32>
    %43 = vector.shape_cast %41 : vector<8x4xf32> to vector<1x8x4xf32>
    %cst_21 = arith.constant dense<0.000000e+00> : vector<1xf32>
    %44 = vector.multi_reduction <add>, %43, %cst_21 [1, 2] : vector<1x8x4xf32> to vector<1xf32>
    %45 = vector.shape_cast %44 : vector<1xf32> to vector<1x1x1xf32>
    %46 = vector.extract %45[0, 0, 0] : f32 from vector<1x1x1xf32>
    %cst_22 = arith.constant 3.125000e-02 : f32
    %47 = arith.mulf %46, %cst_22 : f32
    %48 = vector.broadcast %47 : f32 to vector<8x4xf32>
    %49 = arith.subf %41, %48 : vector<8x4xf32>
    %50 = vector.broadcast %42 : vector<8x1xf32> to vector<8x4xf32>
    %51 = arith.addf %50, %49 : vector<8x4xf32>
    %c0_23 = arith.constant 0 : index
    %c0_24 = arith.constant 0 : index
    %52 = vector.load %arg3[%c0_23, %c0_24] : memref<8x4xf32, #tpu.memory_space<vmem>>, vector<8x4xf32>
    tpu.vector_store %arg3[%c0_23, %c0_24], %51 {strides = array<i32>} : memref<8x4xf32, #tpu.memory_space<vmem>>, vector<8x4xf32>,
    return
  }
}

</mosaic_0001>

<llo_original>
// kernel: tpu_custom_call.1
$region0: #{tpu_custom_call.1}
  #allocation0 [shape = 'u32[]', space=smem, size = 0x4, offset = 0x4, fixed_abs, tag = 'smem constant byte address 0x4 - core index']
  #allocation1 [shape = 'u32[144,128]{1,0:T(1,128)}', space=vmem, size = 0x12000, scoped, tag = 'internal scratch']
  %s0 = inlined_call_operand.hbm [shape: f32[8,128], index: 0, kind: input, shape index: {}]
  %s1 = inlined_call_operand.hbm [shape: f32[4,128,128], index: 1, kind: input, shape index: {}]
  %s2 = inlined_call_operand.vmem [shape: f32[4,128], index: 2, kind: input, shape index: {}]
  %s3 = inlined_call_operand.vmem [shape: f32[8,4], index: 3, kind: output, shape index: {}]
  %s4 = sld [smem:[#allocation0]]
  $region30: #{tpu_custom_call.1} parent=0
    _
  %s6 = ssub.s32 1, %s4
  %s7 = scalar_select 0, %s6, %s4
  $region1: #{tpu_custom_call.1} parent=0
    #allocation2 [shape = 'u8[4096]{0}', space=vmem, size = 0x1000, scoped, tag = 'input window, operand 0, single buffered']
    #allocation3 [shape = 's32[1]{0}', space=sflag, size = 0x4, scoped, tag = 'scoped memory for tpu_custom_call.1']
    #allocation4 [shape = 'u8[262144]{0}', space=vmem, size = 0x40000, scoped, tag = 'input window, operand 1, single buffered']
    #allocation5 [shape = 's32[1]{0}', space=sflag, size = 0x4, scoped, tag = 'scoped memory for tpu_custom_call.1']
    %8 = vsyncpa [#allocation3], 0
    %9 = vsyncpa [#allocation5], 0
    // Predicated region
    $region2: #{tpu_custom_call.1} parent=1 // pred_check
      _
    $region3: #{tpu_custom_call.1} parent=1 // pred_check_branch
      %11 = sbr.rel (0) target = $region5
    $region4: #{tpu_custom_call.1} parent=1 // pred_region
      %s13 = ssub.s32 128, 128
      %14 = vsyncadd [#allocation3], %s13
      %s16 = sshll.u32 [#allocation2], 4
      %s17 = int_to_ptr.vmem [resolvable:$true] %s16
      %19 = dma.hbm_to_vmem [thread:$0]  %s0, 128, %s17, [#allocation3]
    $region5: #{tpu_custom_call.1} parent=1 // pred_fallthru
      _
    // Predicated region
    $region6: #{tpu_custom_call.1} parent=1 // pred_check
      _
    $region7: #{tpu_custom_call.1} parent=1 // pred_check_branch
      %21 = sbr.rel (0) target = $region9
    $region8: #{tpu_custom_call.1} parent=1 // pred_region
      %s23 = ssub.s32 8192, 8192
      %24 = vsyncadd [#allocation5], %s23
      %s25 = sshll.u32 [#allocation4], 4
      %s26 = int_to_ptr.vmem [resolvable:$true] %s25
      %31 = dma.hbm_to_vmem [thread:$0]  %s1, 8192, %s26, [#allocation5], 128, 128, 8
    $region9: #{tpu_custom_call.1} parent=1 // pred_fallthru
      _
    // Predicated region
    $region10: #{tpu_custom_call.1} parent=1 // pred_check
      _
    $region11: #{tpu_custom_call.1} parent=1 // pred_check_branch
      %33 = sbr.rel (0) target = $region13
    $region12: #{tpu_custom_call.1} parent=1 // pred_region
      _
    $region13: #{tpu_custom_call.1} parent=1 // pred_fallthru
      _
    // Predicated region
    $region14: #{tpu_custom_call.1} parent=1 // pred_check
      _
    $region15: #{tpu_custom_call.1} parent=1 // pred_check_branch
      %35 = sbr.rel (0) target = $region17
    $region16: #{tpu_custom_call.1} parent=1 // pred_region
      %36 = dma.done [#allocation3], 128
    $region17: #{tpu_custom_call.1} parent=1 // pred_fallthru
      _
    // Predicated region
    $region18: #{tpu_custom_call.1} parent=1 // pred_check
      _
    $region19: #{tpu_custom_call.1} parent=1 // pred_check_branch
      %38 = sbr.rel (0) target = $region21
    $region20: #{tpu_custom_call.1} parent=1 // pred_region
      %39 = dma.done [#allocation5], 8192
    $region21: #{tpu_custom_call.1} parent=1 // pred_fallthru
      _
    %v40 = vld [vmem:[%s2] sm:$0xf]
    %v41 = vld [vmem:[#allocation2] sm:$0xff]
    %v42 = vld [vmem:[#allocation4] sm:$0xff]
    %v43 = vld [vmem:[#allocation4 + $0x8] sm:$0xff]
    %v44 = vld [vmem:[#allocation4 + $0x10] sm:$0xff]
    %v45 = vld [vmem:[#allocation4 + $0x18] sm:$0xff]
    %v46 = vld [vmem:[#allocation4 + $0x20] sm:$0xff]
    %v47 = vld [vmem:[#allocation4 + $0x28] sm:$0xff]
    %v48 = vld [vmem:[#allocation4 + $0x30] sm:$0xff]
    %v49 = vld [vmem:[#allocation4 + $0x38] sm:$0xff]
    %v50 = vld [vmem:[#allocation4 + $0x40] sm:$0xff]
    %v51 = vld [vmem:[#allocation4 + $0x48] sm:$0xff]
    %v52 = vld [vmem:[#allocation4 + $0x50] sm:$0xff]
    %v53 = vld [vmem:[#allocation4 + $0x58] sm:$0xff]
    %v54 = vld [vmem:[#allocation4 + $0x60] sm:$0xff]
    %v55 = vld [vmem:[#allocation4 + $0x68] sm:$0xff]
    %v56 = vld [vmem:[#allocation4 + $0x70] sm:$0xff]
    %v57 = vld [vmem:[#allocation4 + $0x78] sm:$0xff]
    %v58 = vlaneseq
    %v59 = vshrl.u32 %v58, 7
    %v60 = vsub.s32 0, %v59
    %v61 = vrot.slane %v40, %v60
    %62 = vmatprep.subr.mxu0 0.0
    %63 = vmatpush1.msra.mxu0 %v42
    %64 = vmatprep.subr.mxu0 0.0
    %65 = vmatpush1.msra.mxu0 %v43
    %66 = vmatprep.subr.mxu0 0.0
    %67 = vmatpush1.msra.mxu0 %v44
    %68 = vmatprep.subr.mxu0 0.0
    %69 = vmatpush1.msra.mxu0 %v45
    %70 = vmatprep.subr.mxu0 0.0
    %71 = vmatpush1.msra.mxu0 %v46
    %72 = vmatprep.subr.mxu0 0.0
    %73 = vmatpush1.msra.mxu0 %v47
    %74 = vmatprep.subr.mxu0 0.0
    %75 = vmatpush1.msra.mxu0 %v48
    %76 = vmatprep.subr.mxu0 0.0
    %77 = vmatpush1.msra.mxu0 %v49
    %78 = vmatprep.subr.mxu0 0.0
    %79 = vmatpush1.msra.mxu0 %v50
    %80 = vmatprep.subr.mxu0 0.0
    %81 = vmatpush1.msra.mxu0 %v51
    %82 = vmatprep.subr.mxu0 0.0
    %83 = vmatpush1.msra.mxu0 %v52
    %84 = vmatprep.subr.mxu0 0.0
    %85 = vmatpush1.msra.mxu0 %v53
    %86 = vmatprep.subr.mxu0 0.0
    %87 = vmatpush1.msra.mxu0 %v54
    %88 = vmatprep.subr.mxu0 0.0
    %89 = vmatpush1.msra.mxu0 %v55
    %90 = vmatprep.subr.mxu0 0.0
    %91 = vmatpush1.msra.mxu0 %v56
    %92 = vmatprep.subr.mxu0 0.0
    %93 = vmatpush1.msra.mxu0 %v57
    %94 = vmatprep.subr.mxu0 0.0
    %95 = vmatpush1.msra.mxu0 0.0
    %96 = vmatprep.subr.mxu0 0.0
    %97 = vmatpush1.msra.mxu0 0.0
    %98 = vmatprep.subr.mxu0 0.0
    %99 = vmatpush1.msra.mxu0 0.0
    %100 = vmatprep.subr.mxu0 0.0
    %101 = vmatpush1.msra.mxu0 0.0
    %102 = vmatprep.subr.mxu0 0.0
    %103 = vmatpush1.msra.mxu0 0.0
    %104 = vmatprep.subr.mxu0 0.0
    %105 = vmatpush1.msra.mxu0 0.0
    %106 = vmatprep.subr.mxu0 0.0
    %107 = vmatpush1.msra.mxu0 0.0
    %108 = vmatprep.subr.mxu0 0.0
    %109 = vmatpush1.msra.mxu0 0.0
    %110 = vmatprep.subr.mxu0 0.0
    %111 = vmatpush1.msra.mxu0 0.0
    %112 = vmatprep.subr.mxu0 0.0
    %113 = vmatpush1.msra.mxu0 0.0
    %114 = vmatprep.subr.mxu0 0.0
    %115 = vmatpush1.msra.mxu0 0.0
    %116 = vmatprep.subr.mxu0 0.0
    %117 = vmatpush1.msra.mxu0 0.0
    %118 = vmatprep.subr.mxu0 0.0
    %119 = vmatpush1.msra.mxu0 0.0
    %120 = vmatprep.subr.mxu0 0.0
    %121 = vmatpush1.msra.mxu0 0.0
    %122 = vmatprep.subr.mxu0 0.0
    %123 = vmatpush1.msra.mxu0 0.0
    %124 = vmatprep.subr.mxu0 0.0
    %125 = vmatpush1.msra.mxu0 0.0
    %126 = vmatprep.mubr.f32.mxu0 0.0
    %127 = vmatmul.mubr.f32.gmra.mrb[0].mxu0 %v41
    %v128 = vpop.f32.mrb[0].mxu0
    %v129 = vadd.f32 %v61, %v128
    %v130 = vpop.f32.mrb[0].mxu0
    %131 = vdwg.mxu0
    %vm132 = vcmp.gt.f32.partialorder %v129, 0.0
    %v133 = vmul.f32 %v129, 0.01
    %v134 = vsel %vm132, %v129, %v133
    %s135 = scalar_lea.vmem [#allocation4], 128
    %v136 = vld [vmem:[%s135] sm:$0xff]
    %v137 = vld [vmem:[%s135 + $0x8] sm:$0xff]
    %v138 = vld [vmem:[%s135 + $0x10] sm:$0xff]
    %v139 = vld [vmem:[%s135 + $0x18] sm:$0xff]
    %v140 = vld [vmem:[%s135 + $0x20] sm:$0xff]
    %v141 = vld [vmem:[%s135 + $0x28] sm:$0xff]
    %v142 = vld [vmem:[%s135 + $0x30] sm:$0xff]
    %v143 = vld [vmem:[%s135 + $0x38] sm:$0xff]
    %v144 = vld [vmem:[%s135 + $0x40] sm:$0xff]
    %v145 = vld [vmem:[%s135 + $0x48] sm:$0xff]
    %v146 = vld [vmem:[%s135 + $0x50] sm:$0xff]
    %v147 = vld [vmem:[%s135 + $0x58] sm:$0xff]
    %v148 = vld [vmem:[%s135 + $0x60] sm:$0xff]
    %v149 = vld [vmem:[%s135 + $0x68] sm:$0xff]
    %v150 = vld [vmem:[%s135 + $0x70] sm:$0xff]
    %v151 = vld [vmem:[%s135 + $0x78] sm:$0xff]
    %v152 = vlaneseq
    %v153 = vshrl.u32 %v152, 7
    %v154 = vsub.s32 1, %v153
    %v155 = vrot.slane %v40, %v154
    %156 = vmatprep.subr.mxu0 0.0
    %157 = vmatpush1.msra.mxu0 %v136
    %158 = vmatprep.subr.mxu0 0.0
    %159 = vmatpush1.msra.mxu0 %v137
    %160 = vmatprep.subr.mxu0 0.0
    %161 = vmatpush1.msra.mxu0 %v138
    %162 = vmatprep.subr.mxu0 0.0
    %163 = vmatpush1.msra.mxu0 %v139
    %164 = vmatprep.subr.mxu0 0.0
    %165 = vmatpush1.msra.mxu0 %v140
    %166 = vmatprep.subr.mxu0 0.0
    %167 = vmatpush1.msra.mxu0 %v141
    %168 = vmatprep.subr.mxu0 0.0
    %169 = vmatpush1.msra.mxu0 %v142
    %170 = vmatprep.subr.mxu0 0.0
    %171 = vmatpush1.msra.mxu0 %v143
    %172 = vmatprep.subr.mxu0 0.0
    %173 = vmatpush1.msra.mxu0 %v144
    %174 = vmatprep.subr.mxu0 0.0
    %175 = vmatpush1.msra.mxu0 %v145
    %176 = vmatprep.subr.mxu0 0.0
    %177 = vmatpush1.msra.mxu0 %v146
    %178 = vmatprep.subr.mxu0 0.0
    %179 = vmatpush1.msra.mxu0 %v147
    %180 = vmatprep.subr.mxu0 0.0
    %181 = vmatpush1.msra.mxu0 %v148
    %182 = vmatprep.subr.mxu0 0.0
    %183 = vmatpush1.msra.mxu0 %v149
    %184 = vmatprep.subr.mxu0 0.0
    %185 = vmatpush1.msra.mxu0 %v150
    %186 = vmatprep.subr.mxu0 0.0
    %187 = vmatpush1.msra.mxu0 %v151
    %188 = vmatprep.subr.mxu0 0.0
    %189 = vmatpush1.msra.mxu0 0.0
    %190 = vmatprep.subr.mxu0 0.0
    %191 = vmatpush1.msra.mxu0 0.0
    %192 = vmatprep.subr.mxu0 0.0
    %193 = vmatpush1.msra.mxu0 0.0
    %194 = vmatprep.subr.mxu0 0.0
    %195 = vmatpush1.msra.mxu0 0.0
    %196 = vmatprep.subr.mxu0 0.0
    %197 = vmatpush1.msra.mxu0 0.0
    %198 = vmatprep.subr.mxu0 0.0
    %199 = vmatpush1.msra.mxu0 0.0
    %200 = vmatprep.subr.mxu0 0.0
    %201 = vmatpush1.msra.mxu0 0.0
    %202 = vmatprep.subr.mxu0 0.0
    %203 = vmatpush1.msra.mxu0 0.0
    %204 = vmatprep.subr.mxu0 0.0
    %205 = vmatpush1.msra.mxu0 0.0
    %206 = vmatprep.subr.mxu0 0.0
    %207 = vmatpush1.msra.mxu0 0.0
    %208 = vmatprep.subr.mxu0 0.0
    %209 = vmatpush1.msra.mxu0 0.0
    %210 = vmatprep.subr.mxu0 0.0
    %211 = vmatpush1.msra.mxu0 0.0
    %212 = vmatprep.subr.mxu0 0.0
    %213 = vmatpush1.msra.mxu0 0.0
    %214 = vmatprep.subr.mxu0 0.0
    %215 = vmatpush1.msra.mxu0 0.0
    %216 = vmatprep.subr.mxu0 0.0
    %217 = vmatpush1.msra.mxu0 0.0
    %218 = vmatprep.subr.mxu0 0.0
    %219 = vmatpush1.msra.mxu0 0.0
    %220 = vmatprep.mubr.f32.mxu0 0.0
    %221 = vmatmul.mubr.f32.gmra.mrb[0].mxu0 %v134
    %v222 = vpop.f32.mrb[0].mxu0
    %v223 = vadd.f32 %v155, %v222
    %v224 = vpop.f32.mrb[0].mxu0
    %225 = vdwg.mxu0
    %vm226 = vcmp.gt.f32.partialorder %v223, 0.0
    %v227 = vmul.f32 %v223, 0.01
    %v228 = vsel %vm226, %v223, %v227
    %s229 = scalar_lea.vmem [#allocation4], 256
    %v230 = vld [vmem:[%s229] sm:$0xff]
    %v231 = vld [vmem:[%s229 + $0x8] sm:$0xff]
    %v232 = vld [vmem:[%s229 + $0x10] sm:$0xff]
    %v233 = vld [vmem:[%s229 + $0x18] sm:$0xff]
    %v234 = vld [vmem:[%s229 + $0x20] sm:$0xff]
    %v235 = vld [vmem:[%s229 + $0x28] sm:$0xff]
    %v236 = vld [vmem:[%s229 + $0x30] sm:$0xff]
    %v237 = vld [vmem:[%s229 + $0x38] sm:$0xff]
    %v238 = vld [vmem:[%s229 + $0x40] sm:$0xff]
    %v239 = vld [vmem:[%s229 + $0x48] sm:$0xff]
    %v240 = vld [vmem:[%s229 + $0x50] sm:$0xff]
    %v241 = vld [vmem:[%s229 + $0x58] sm:$0xff]
    %v242 = vld [vmem:[%s229 + $0x60] sm:$0xff]
    %v243 = vld [vmem:[%s229 + $0x68] sm:$0xff]
    %v244 = vld [vmem:[%s229 + $0x70] sm:$0xff]
    %v245 = vld [vmem:[%s229 + $0x78] sm:$0xff]
    %v246 = vlaneseq
    %v247 = vshrl.u32 %v246, 7
    %v248 = vsub.s32 2, %v247
    %v249 = vrot.slane %v40, %v248
    %250 = vmatprep.subr.mxu0 0.0
    %251 = vmatpush1.msra.mxu0 %v230
    %252 = vmatprep.subr.mxu0 0.0
    %253 = vmatpush1.msra.mxu0 %v231
    %254 = vmatprep.subr.mxu0 0.0
    %255 = vmatpush1.msra.mxu0 %v232
    %256 = vmatprep.subr.mxu0 0.0
    %257 = vmatpush1.msra.mxu0 %v233
    %258 = vmatprep.subr.mxu0 0.0
    %259 = vmatpush1.msra.mxu0 %v234
    %260 = vmatprep.subr.mxu0 0.0
    %261 = vmatpush1.msra.mxu0 %v235
    %262 = vmatprep.subr.mxu0 0.0
    %263 = vmatpush1.msra.mxu0 %v236
    %264 = vmatprep.subr.mxu0 0.0
    %265 = vmatpush1.msra.mxu0 %v237
    %266 = vmatprep.subr.mxu0 0.0
    %267 = vmatpush1.msra.mxu0 %v238
    %268 = vmatprep.subr.mxu0 0.0
    %269 = vmatpush1.msra.mxu0 %v239
    %270 = vmatprep.subr.mxu0 0.0
    %271 = vmatpush1.msra.mxu0 %v240
    %272 = vmatprep.subr.mxu0 0.0
    %273 = vmatpush1.msra.mxu0 %v241
    %274 = vmatprep.subr.mxu0 0.0
    %275 = vmatpush1.msra.mxu0 %v242
    %276 = vmatprep.subr.mxu0 0.0
    %277 = vmatpush1.msra.mxu0 %v243
    %278 = vmatprep.subr.mxu0 0.0
    %279 = vmatpush1.msra.mxu0 %v244
    %280 = vmatprep.subr.mxu0 0.0
    %281 = vmatpush1.msra.mxu0 %v245
    %282 = vmatprep.subr.mxu0 0.0
    %283 = vmatpush1.msra.mxu0 0.0
    %284 = vmatprep.subr.mxu0 0.0
    %285 = vmatpush1.msra.mxu0 0.0
    %286 = vmatprep.subr.mxu0 0.0
    %287 = vmatpush1.msra.mxu0 0.0
    %288 = vmatprep.subr.mxu0 0.0
    %289 = vmatpush1.msra.mxu0 0.0
    %290 = vmatprep.subr.mxu0 0.0
    %291 = vmatpush1.msra.mxu0 0.0
    %292 = vmatprep.subr.mxu0 0.0
    %293 = vmatpush1.msra.mxu0 0.0
    %294 = vmatprep.subr.mxu0 0.0
    %295 = vmatpush1.msra.mxu0 0.0
    %296 = vmatprep.subr.mxu0 0.0
    %297 = vmatpush1.msra.mxu0 0.0
    %298 = vmatprep.subr.mxu0 0.0
    %299 = vmatpush1.msra.mxu0 0.0
    %300 = vmatprep.subr.mxu0 0.0
    %301 = vmatpush1.msra.mxu0 0.0
    %302 = vmatprep.subr.mxu0 0.0
    %303 = vmatpush1.msra.mxu0 0.0
    %304 = vmatprep.subr.mxu0 0.0
    %305 = vmatpush1.msra.mxu0 0.0
    %306 = vmatprep.subr.mxu0 0.0
    %307 = vmatpush1.msra.mxu0 0.0
    %308 = vmatprep.subr.mxu0 0.0
    %309 = vmatpush1.msra.mxu0 0.0
    %310 = vmatprep.subr.mxu0 0.0
    %311 = vmatpush1.msra.mxu0 0.0
    %312 = vmatprep.subr.mxu0 0.0
    %313 = vmatpush1.msra.mxu0 0.0
    %314 = vmatprep.mubr.f32.mxu0 0.0
    %315 = vmatmul.mubr.f32.gmra.mrb[0].mxu0 %v228
    %v316 = vpop.f32.mrb[0].mxu0
    %v317 = vadd.f32 %v249, %v316
    %v318 = vpop.f32.mrb[0].mxu0
    %319 = vdwg.mxu0
    %vm320 = vcmp.gt.f32.partialorder %v317, 0.0
    %v321 = vmul.f32 %v317, 0.01
    %v322 = vsel %vm320, %v317, %v321
    %s323 = scalar_lea.vmem [#allocation4], 384
    %v324 = vld [vmem:[%s323] sm:$0xff]
    %v325 = vld [vmem:[%s323 + $0x8] sm:$0xff]
    %v326 = vld [vmem:[%s323 + $0x10] sm:$0xff]
    %v327 = vld [vmem:[%s323 + $0x18] sm:$0xff]
    %v328 = vld [vmem:[%s323 + $0x20] sm:$0xff]
    %v329 = vld [vmem:[%s323 + $0x28] sm:$0xff]
    %v330 = vld [vmem:[%s323 + $0x30] sm:$0xff]
    %v331 = vld [vmem:[%s323 + $0x38] sm:$0xff]
    %v332 = vld [vmem:[%s323 + $0x40] sm:$0xff]
    %v333 = vld [vmem:[%s323 + $0x48] sm:$0xff]
    %v334 = vld [vmem:[%s323 + $0x50] sm:$0xff]
    %v335 = vld [vmem:[%s323 + $0x58] sm:$0xff]
    %v336 = vld [vmem:[%s323 + $0x60] sm:$0xff]
    %v337 = vld [vmem:[%s323 + $0x68] sm:$0xff]
    %v338 = vld [vmem:[%s323 + $0x70] sm:$0xff]
    %v339 = vld [vmem:[%s323 + $0x78] sm:$0xff]
    %v340 = vlaneseq
    %v341 = vshrl.u32 %v340, 7
    %v342 = vsub.s32 3, %v341
    %v343 = vrot.slane %v40, %v342
    %344 = vmatprep.subr.mxu0 0.0
    %345 = vmatpush1.msra.mxu0 %v324
    %346 = vmatprep.subr.mxu0 0.0
    %347 = vmatpush1.msra.mxu0 %v325
    %348 = vmatprep.subr.mxu0 0.0
    %349 = vmatpush1.msra.mxu0 %v326
    %350 = vmatprep.subr.mxu0 0.0
    %351 = vmatpush1.msra.mxu0 %v327
    %352 = vmatprep.subr.mxu0 0.0
    %353 = vmatpush1.msra.mxu0 %v328
    %354 = vmatprep.subr.mxu0 0.0
    %355 = vmatpush1.msra.mxu0 %v329
    %356 = vmatprep.subr.mxu0 0.0
    %357 = vmatpush1.msra.mxu0 %v330
    %358 = vmatprep.subr.mxu0 0.0
    %359 = vmatpush1.msra.mxu0 %v331
    %360 = vmatprep.subr.mxu0 0.0
    %361 = vmatpush1.msra.mxu0 %v332
    %362 = vmatprep.subr.mxu0 0.0
    %363 = vmatpush1.msra.mxu0 %v333
    %364 = vmatprep.subr.mxu0 0.0
    %365 = vmatpush1.msra.mxu0 %v334
    %366 = vmatprep.subr.mxu0 0.0
    %367 = vmatpush1.msra.mxu0 %v335
    %368 = vmatprep.subr.mxu0 0.0
    %369 = vmatpush1.msra.mxu0 %v336
    %370 = vmatprep.subr.mxu0 0.0
    %371 = vmatpush1.msra.mxu0 %v337
    %372 = vmatprep.subr.mxu0 0.0
    %373 = vmatpush1.msra.mxu0 %v338
    %374 = vmatprep.subr.mxu0 0.0
    %375 = vmatpush1.msra.mxu0 %v339
    %376 = vmatprep.subr.mxu0 0.0
    %377 = vmatpush1.msra.mxu0 0.0
    %378 = vmatprep.subr.mxu0 0.0
    %379 = vmatpush1.msra.mxu0 0.0
    %380 = vmatprep.subr.mxu0 0.0
    %381 = vmatpush1.msra.mxu0 0.0
    %382 = vmatprep.subr.mxu0 0.0
    %383 = vmatpush1.msra.mxu0 0.0
    %384 = vmatprep.subr.mxu0 0.0
    %385 = vmatpush1.msra.mxu0 0.0
    %386 = vmatprep.subr.mxu0 0.0
    %387 = vmatpush1.msra.mxu0 0.0
    %388 = vmatprep.subr.mxu0 0.0
    %389 = vmatpush1.msra.mxu0 0.0
    %390 = vmatprep.subr.mxu0 0.0
    %391 = vmatpush1.msra.mxu0 0.0
    %392 = vmatprep.subr.mxu0 0.0
    %393 = vmatpush1.msra.mxu0 0.0
    %394 = vmatprep.subr.mxu0 0.0
    %395 = vmatpush1.msra.mxu0 0.0
    %396 = vmatprep.subr.mxu0 0.0
    %397 = vmatpush1.msra.mxu0 0.0
    %398 = vmatprep.subr.mxu0 0.0
    %399 = vmatpush1.msra.mxu0 0.0
    %400 = vmatprep.subr.mxu0 0.0
    %401 = vmatpush1.msra.mxu0 0.0
    %402 = vmatprep.subr.mxu0 0.0
    %403 = vmatpush1.msra.mxu0 0.0
    %404 = vmatprep.subr.mxu0 0.0
    %405 = vmatpush1.msra.mxu0 0.0
    %406 = vmatprep.subr.mxu0 0.0
    %407 = vmatpush1.msra.mxu0 0.0
    %408 = vmatprep.mubr.f32.mxu0 0.0
    %409 = vmatmul.mubr.f32.gmra.mrb[0].mxu0 %v322
    %v410 = vpop.f32.mrb[0].mxu0
    %v411 = vadd.f32 %v343, %v410
    %v412 = vpop.f32.mrb[0].mxu0
    %413 = vdwg.mxu0
    %vm414 = vcmask 31744
    %v415 = vsel %vm414, %v411, 0.0
    %416 = vadd.xlane.f32.xlu0 %v415
    %v417 = vpop.xlane.xlu0 %416
    %v418 = vrot.slane %v417, 4
    %v419 = vadd.f32 %v417, %v418
    %v420 = vrot.slane %v419, 2
    %v421 = vadd.f32 %v419, %v420
    %v422 = vrot.slane %v421, 1
    %v423 = vadd.f32 %v421, %v422
    %s424 = vtos %v423
    %s425 = smul.f32 %s424, 0.03125
    %v426 = vstv %s425
    %v427 = vsub.f32 %v411, %v426
    %429 = vset.pattern.permute.xlu0 4
    %430 = vperm.xlu0 %429, %v411
    %v431 = vpop.permute.xlu0 %430
    %v433 = vadd.f32 %v431, %v427
    %434 = vst.msk [vmem:[%s3] sm:$0xff] %vm414, %v433
    // Predicated region
    $region22: #{tpu_custom_call.1} parent=1 // pred_check
      _
    $region23: #{tpu_custom_call.1} parent=1 // pred_check_branch
      %436 = sbr.rel (0) target = $region25
    $region24: #{tpu_custom_call.1} parent=1 // pred_region
      _
    $region25: #{tpu_custom_call.1} parent=1 // pred_fallthru
      _
    // Predicated region
    $region26: #{tpu_custom_call.1} parent=1 // pred_check
      _
    $region27: #{tpu_custom_call.1} parent=1 // pred_check_branch
      %438 = sbr.rel (0) target = $region29
    $region28: #{tpu_custom_call.1} parent=1 // pred_region
      _
    $region29: #{tpu_custom_call.1} parent=1 // pred_fallthru
      _
    %439 = vsyncpa [#allocation3], 1
    %440 = vsyncpa [#allocation5], 1

</llo_original>
